<compile_context>
chip_gen: v6e
topology: v6e:2x2x1
jax: 0.10.0
libtpu: 0.0.40
codegen_flags: <defaults>
</compile_context>

<pallas_src>
import functools

import numpy as np
import jax
import jax.numpy as jnp
from jax.experimental import pallas as pl
from jax.experimental.pallas import tpu as pltpu


def _round_up(v, m):
    return (v + m - 1) // m * m


def gcn_spmm_kernel(a_ref, z_ref, dr_ref, b_ref, o_ref, acc_ref, *, tk, z_resident):
    k = pl.program_id(1)

    @pl.when(k == 0)
    def _():
        acc_ref[...] = jnp.zeros_like(acc_ref)

    # int8 (A+I) tile -> bf16 on the VPU (hides under the HBM-bound DMA),
    # then the dominant N^2 product on the MXU with f32 accumulation.
    a_bf = a_ref[...].astype(jnp.float32).astype(jnp.bfloat16)
    if z_resident:
        off = pl.multiple_of(k * tk, tk)
        z_blk = z_ref[pl.ds(off, tk), :]          # slice the VMEM-resident Z slab
    else:
        z_blk = z_ref[...]                        # streamed (tk, Fout_pad) tile
    acc_ref[...] += jnp.dot(a_bf, z_blk, preferred_element_type=jnp.float32)

    @pl.when(k == pl.num_programs(1) - 1)
    def _():
        # Row-side D^{-1/2} (commutes with the matmul) + bias; lane-dense store.
        o_ref[...] = (acc_ref[...] * dr_ref[...] + b_ref[...]).astype(o_ref.dtype)


def gcn_conv_pallas(a_p, z_p, dr_p, b_p, tm, tk):
    """a_p: (Np, Np) int8 (A+I); z_p: (Np, Fout_pad) bf16 = (D^{-1/2}X)W;
    dr_p: (Np, 1) f32 row scale; b_p: (1, Fout_pad) f32 bias."""
    n_pad = a_p.shape[0]
    fout_pad = z_p.shape[1]
    grid = (n_pad // tm, n_pad // tk)

    # Keep Z resident in VMEM when (double-buffered) it stays well under the
    # v7x 64 MiB budget; otherwise stream it per k-block.
    z_resident = (2 * n_pad * fout_pad * 2) <= (16 * 1024 * 1024)
    if z_resident:
        z_spec = pl.BlockSpec((n_pad, fout_pad), lambda i, k: (0, 0))
    else:
        z_spec = pl.BlockSpec((tk, fout_pad), lambda i, k: (k, 0))

    cost = pl.CostEstimate(
        flops=2 * n_pad * n_pad * fout_pad,
        transcendentals=0,
        bytes_accessed=int(a_p.size                      # int8 A, read once
                           + z_p.size * 2                # bf16 Z
                           + dr_p.size * 4 + b_p.size * 4
                           + n_pad * fout_pad * 4),      # f32 output
    )

    vmem_need = (2 * tm * tk                                             # int8 A tiles (x2)
                 + (2 * n_pad * fout_pad * 2 if z_resident
                    else 2 * tk * fout_pad * 2)                          # Z buffers
                 + tm * fout_pad * 4                                     # f32 accumulator
                 + 2 * tm * fout_pad * 4                                 # output tiles
                 + 2 * tm * 4 + 2 * fout_pad * 4)                        # dr / bias
    vmem_limit = int(min(max(2 * vmem_need, 16 * 1024 * 1024), 48 * 1024 * 1024))

    kern = functools.partial(gcn_spmm_kernel, tk=tk, z_resident=z_resident)

    return pl.pallas_call(
        kern,
        out_shape=jax.ShapeDtypeStruct((n_pad, fout_pad), jnp.float32),
        grid_spec=pltpu.PrefetchScalarGridSpec(
            num_scalar_prefetch=0,
            grid=grid,
            in_specs=[
                pl.BlockSpec((tm, tk), lambda i, k: (i, k)),        # int8 (A+I) tile
                z_spec,                                             # Z (resident or streamed)
                pl.BlockSpec((tm, 1), lambda i, k: (i, 0)),         # row D^{-1/2}
                pl.BlockSpec((1, fout_pad), lambda i, k: (0, 0)),   # bias
            ],
            out_specs=pl.BlockSpec((tm, fout_pad), lambda i, k: (i, 0)),
            scratch_shapes=[pltpu.VMEM((tm, fout_pad), jnp.float32)],
        ),
        compiler_params=pltpu.CompilerParams(
            dimension_semantics=("parallel", "arbitrary"),
            vmem_limit_bytes=vmem_limit),
        cost_estimate=cost,
    )(a_p, z_p, dr_p, b_p)


def gcn_forward(x, edge_index, w, b):
    n, fin = x.shape
    fout = w.shape[1]

    # Tile choice: 512 amortizes per-step overhead for big graphs; 256 keeps
    # >=2 row blocks on the "parallel" axis (v7x megacore) for small graphs.
    tm = tk = 512 if n >= 1024 else 256
    n_pad = _round_up(n, tm)
    fout_pad = _round_up(fout, 128)

    # --- O(E) preprocessing: self-loops appended to the edge list, degree via
    #     segment-sum; the dense padded int8 (A+I) is written in one pass. ---
    src = edge_index[0].astype(jnp.int32)
    tgt = edge_index[1].astype(jnp.int32)
    loop = jnp.arange(n, dtype=jnp.int32)
    src_all = jnp.concatenate([src, loop])
    tgt_all = jnp.concatenate([tgt, loop])

    deg = jnp.zeros((n,), jnp.float32).at[tgt_all].add(1.0)      # row sum of (A+I)
    d_inv_sqrt = jnp.where(deg > 0, jax.lax.rsqrt(deg), 0.0)

    # int8 storage is exact while per-pair edge multiplicity stays <= 127.
    a_p = (jnp.zeros((n_pad, n_pad), jnp.int32)
           .at[tgt_all, src_all].add(1)
           .astype(jnp.int8))

    # Z = (D^{-1/2} X) @ W : tiny matmul done once in the wrapper at high
    # precision, stored bf16 and padded to 128 lanes.
    z = jnp.dot(x * d_inv_sqrt[:, None], w,
                precision=jax.lax.Precision.HIGHEST)             # (n, fout) f32
    z_p = jnp.zeros((n_pad, fout_pad), jnp.bfloat16).at[:n, :fout].set(
        z.astype(jnp.bfloat16))
    dr_p = jnp.zeros((n_pad, 1), jnp.float32).at[:n, 0].set(d_inv_sqrt)
    b_p = jnp.zeros((1, fout_pad), jnp.float32).at[0, :fout].set(b)

    out = gcn_conv_pallas(a_p, z_p, dr_p, b_p, tm, tk)
    return out[:n, :fout]


class GCNPallas:
    """Mirrors the PyTorch GCN module; forward applies only conv0 (as in ref)."""

    def __init__(self, input_dim, hidden_dim_ls, output_dim, key):
        out0 = hidden_dim_ls[0]
        limit = float(np.sqrt(6.0 / (input_dim + out0)))
        self.w0 = jax.random.uniform(
            key, (input_dim, out0), jnp.float32, minval=-limit, maxval=limit)
        self.b0 = jnp.zeros((out0,), jnp.float32)
        self._fwd = jax.jit(gcn_forward)
        # TODO(synk): conv1..convN (and the ReLUs) are constructed in the PyTorch
        # __init__ but never used by the reference forward(), so not materialized.

    def forward(self, x, edge_index):
        return self._fwd(x, edge_index, self.w0, self.b0)


if __name__ == "__main__":
    key = jax.random.PRNGKey(0)
    k_x, k_e, k_w = jax.random.split(key, 3)

    num_nodes = 512
    input_dim = 8
    hidden_dim_ls = [32]
    output_dim = 4
    num_edges = 2048

    x = jax.random.normal(k_x, (num_nodes, input_dim), jnp.float32)
    edge_index = jax.random.randint(k_e, (2, num_edges), 0, num_nodes, jnp.int32)

    model = GCNPallas(input_dim, hidden_dim_ls, output_dim, k_w)
    out = model.forward(x, edge_index)
    out = jax.block_until_ready(out)
    assert out.shape == (num_nodes, hidden_dim_ls[0])

    # --- Reference checks (numpy, full f32 accumulation) ---
    src = np.asarray(edge_index[0])
    tgt = np.asarray(edge_index[1])
    a = np.zeros((num_nodes, num_nodes), np.float32)
    np.add.at(a, (tgt, src), 1.0)
    a += np.eye(num_nodes, dtype=np.float32)
    deg = a.sum(axis=1)
    dis = np.where(deg > 0, 1.0 / np.sqrt(deg), 0.0).astype(np.float32)

    x_np = np.asarray(x, np.float32)
    w_np = np.asarray(model.w0, np.float32)
    b_np = np.asarray(model.b0, np.float32)

    # (1) matched reference: same bf16-quantized Z the kernel consumes, f32 math.
    z_bf = np.asarray(
        ((x_np * dis[:, None]) @ w_np).astype(jnp.bfloat16).astype(np.float32))
    ref_bf = dis[:, None] * (a @ z_bf) + b_np[None, :]
    np.testing.assert_allclose(np.asarray(out), ref_bf, rtol=2e-2, atol=2e-2)

    # (2) full-f32 semantic reference; tolerance loosened for the bf16 cast of Z.
    a_hat = dis[:, None] * a * dis[None, :]
    ref = a_hat @ (x_np @ w_np) + b_np[None, :]
    np.testing.assert_allclose(np.asarray(out), ref, rtol=5e-2, atol=5e-2)

    print("KERNEL_OK")
</pallas_src>

<mosaic_0001>
module attributes {stable_mosaic.version = 11 : i64} {
  func.func private @main(%arg0: i32) attributes {dimension_semantics = [#tpu.dimension_semantics<core_parallel>], iteration_bounds = array<i64: 2>, tpu.core_type = #tpu.core_type<sc_scalar_subcore>, window_params = []} {
    return
  }
}

module attributes {stable_mosaic.version = 11 : i64} {
  func.func private @main(%arg0: i32) attributes {dimension_semantics = [#tpu.dimension_semantics<core_parallel>], iteration_bounds = array<i64: 2>, tpu.core_type = #tpu.core_type<sc_scalar_subcore>, window_params = []} {
    return
  }
}

module attributes {stable_mosaic.version = 11 : i64} {
  func.func @gcn_spmm_kernel(%arg0: i32, %arg1: i32, %arg2: memref<256x256xi8, #tpu.memory_space<vmem>>, %arg3: memref<512x128xbf16, #tpu.memory_space<vmem>>, %arg4: memref<256x1xf32, #tpu.memory_space<vmem>>, %arg5: memref<1x128xf32, #tpu.memory_space<vmem>>, %arg6: memref<256x128xf32, #tpu.memory_space<vmem>>, %arg7: memref<256x128xf32, #tpu.memory_space<vmem>>) attributes {dimension_semantics = [#tpu.dimension_semantics<parallel>, #tpu.dimension_semantics<arbitrary>], iteration_bounds = array<i64: 2, 2>, scalar_prefetch = 0 : i64, scratch_operands = 1 : i64, tpu.core_type = #tpu.core_type<tc>, window_params = [{transform_indices = @transform_0, window_bounds = array<i64: 256, 256>}, {pipeline_mode = #tpu.pipeline_mode<synchronous>, transform_indices = @transform_1, window_bounds = array<i64: 512, 128>}, {transform_indices = @transform_2, window_bounds = array<i64: 256, 1>}, {pipeline_mode = #tpu.pipeline_mode<synchronous>, transform_indices = @transform_3, window_bounds = array<i64: 1, 128>}, {transform_indices = @transform_4, window_bounds = array<i64: 256, 128>}]} {
    %c0_i32 = arith.constant 0 : i32
    %0 = arith.cmpi eq, %arg1, %c0_i32 : i32
    %1 = arith.extui %0 : i1 to i32
    %c0_i32_0 = arith.constant 0 : i32
    %2 = arith.cmpi ne, %1, %c0_i32_0 : i32
    scf.if %2 {
      %cst_8 = arith.constant 0.000000e+00 : f32
      %17 = vector.broadcast %cst_8 : f32 to vector<256x128xf32>
      %c0_9 = arith.constant 0 : index
      %c0_10 = arith.constant 0 : index
      %18 = vector.load %arg7[%c0_9, %c0_10] : memref<256x128xf32, #tpu.memory_space<vmem>>, vector<256x128xf32>
      tpu.vector_store %arg7[%c0_9, %c0_10], %17 {strides = array<i32>} : memref<256x128xf32, #tpu.memory_space<vmem>>, vector<256x128xf32>,
    } else {
    }
    %c0 = arith.constant 0 : index
    %c0_1 = arith.constant 0 : index
    %3 = vector.load %arg2[%c0, %c0_1] : memref<256x256xi8, #tpu.memory_space<vmem>>, vector<256x256xi8>
    %4 = arith.sitofp %3 : vector<256x256xi8> to vector<256x256xf32>
    %5 = arith.truncf %4 : vector<256x256xf32> to vector<256x256xbf16>
    %c256_i32 = arith.constant 256 : i32
    %6 = arith.muli %arg1, %c256_i32 : i32
    %7 = tpu.assume_multiple %6, 256 : i32
    %8 = arith.index_cast %7 : i32 to index
    %c0_2 = arith.constant 0 : index
    %9 = vector.load %arg3[%8, %c0_2] : memref<512x128xbf16, #tpu.memory_space<vmem>>, vector<256x128xbf16>
    %c0_3 = arith.constant 0 : index
    %c0_4 = arith.constant 0 : index
    %10 = vector.load %arg7[%c0_3, %c0_4] : memref<256x128xf32, #tpu.memory_space<vmem>>, vector<256x128xf32>
    %cst = arith.constant dense<0.000000e+00> : vector<256x128xf32>
    %11 = tpu.matmul %5, %9, %cst {dimension_numbers = #tpu.dot_dimension_numbers<[1], [0], [0], [1], [0, 0, 1, 1], [], []>} : vector<256x256xbf16>, vector<256x128xbf16>, vector<256x128xf32> -> vector<256x128xf32>
    %12 = arith.addf %10, %11 : vector<256x128xf32>
    %c0_5 = arith.constant 0 : index
    %c0_6 = arith.constant 0 : index
    %13 = vector.load %arg7[%c0_5, %c0_6] : memref<256x128xf32, #tpu.memory_space<vmem>>, vector<256x128xf32>
    tpu.vector_store %arg7[%c0_5, %c0_6], %12 {strides = array<i32>} : memref<256x128xf32, #tpu.memory_space<vmem>>, vector<256x128xf32>,
    %c1_i32 = arith.constant 1 : i32
    %14 = arith.cmpi eq, %arg1, %c1_i32 : i32
    %15 = arith.extui %14 : i1 to i32
    %c0_i32_7 = arith.constant 0 : i32
    %16 = arith.cmpi ne, %15, %c0_i32_7 : i32
    scf.if %16 {
      %c0_8 = arith.constant 0 : index
      %c0_9 = arith.constant 0 : index
      %17 = vector.load %arg7[%c0_8, %c0_9] : memref<256x128xf32, #tpu.memory_space<vmem>>, vector<256x128xf32>
      %c0_10 = arith.constant 0 : index
      %c0_11 = arith.constant 0 : index
      %18 = vector.load %arg4[%c0_10, %c0_11] : memref<256x1xf32, #tpu.memory_space<vmem>>, vector<256x1xf32>
      %19 = vector.broadcast %18 : vector<256x1xf32> to vector<256x128xf32>
      %20 = arith.mulf %17, %19 : vector<256x128xf32>
      %c0_12 = arith.constant 0 : index
      %c0_13 = arith.constant 0 : index
      %21 = vector.load %arg5[%c0_12, %c0_13] : memref<1x128xf32, #tpu.memory_space<vmem>>, vector<1x128xf32>
      %22 = vector.broadcast %21 : vector<1x128xf32> to vector<256x128xf32>
      %23 = arith.addf %20, %22 : vector<256x128xf32>
      %c0_14 = arith.constant 0 : index
      %c0_15 = arith.constant 0 : index
      %24 = vector.load %arg6[%c0_14, %c0_15] : memref<256x128xf32, #tpu.memory_space<vmem>>, vector<256x128xf32>
      tpu.vector_store %arg6[%c0_14, %c0_15], %23 {strides = array<i32>} : memref<256x128xf32, #tpu.memory_space<vmem>>, vector<256x128xf32>,
    } else {
    }
    return
  }
  func.func @transform_0(%arg0: i32, %arg1: i32) -> (i32, i32) {
    %c0_i32 = arith.constant 0 : i32
    return %arg0, %arg1 : i32, i32
  }
  func.func @transform_1(%arg0: i32, %arg1: i32) -> (i32, i32) {
    %c0_i32 = arith.constant 0 : i32
    %c0_i32_0 = arith.constant 0 : i32
    %c0_i32_1 = arith.constant 0 : i32
    return %c0_i32, %c0_i32_0 : i32, i32
  }
  func.func @transform_2(%arg0: i32, %arg1: i32) -> (i32, i32) {
    %c0_i32 = arith.constant 0 : i32
    %c0_i32_0 = arith.constant 0 : i32
    return %arg0, %c0_i32 : i32, i32
  }
  func.func @transform_3(%arg0: i32, %arg1: i32) -> (i32, i32) {
    %c0_i32 = arith.constant 0 : i32
    %c0_i32_0 = arith.constant 0 : i32
    %c0_i32_1 = arith.constant 0 : i32
    return %c0_i32, %c0_i32_0 : i32, i32
  }
  func.func @transform_4(%arg0: i32, %arg1: i32) -> (i32, i32) {
    %c0_i32 = arith.constant 0 : i32
    %c0_i32_0 = arith.constant 0 : i32
    return %arg0, %c0_i32 : i32, i32
  }
}

</mosaic_0001>

<llo_original>
// kernel: gcn_forward.1
$region0: #{gcn_forward.1}
  #allocation0 [shape = 'u32[]', space=smem, size = 0x4, offset = 0x4, fixed_abs, tag = 'smem constant byte address 0x4 - core index']
  #allocation1 [shape = 'u32[144,128]{1,0:T(1,128)}', space=vmem, size = 0x12000, scoped, tag = 'internal scratch']
  #allocation2 [shape = 'f32[256,128]{1,0:T(8,128)}', space=vmem, size = 0x20000, scoped, tag = 'scratch operand']
  %s0 = inlined_call_operand.vmem [shape: s8[512,512], index: 0, kind: input, shape index: {}]
  %s1 = inlined_call_operand.vmem [shape: bf16[512,128], index: 1, kind: input, shape index: {}]
  %s2 = inlined_call_operand.vmem [shape: f32[512,1], index: 2, kind: input, shape index: {}]
  %s3 = inlined_call_operand.vmem [shape: f32[1,128], index: 3, kind: input, shape index: {}]
  %s4 = inlined_call_operand.vmem [shape: f32[512,128], index: 4, kind: output, shape index: {}]
  %s5 = sld [smem:[#allocation0]]
  $region80: #{gcn_forward.1} parent=0
    _
  %s7 = ssub.s32 1, %s5
  %s8 = scalar_select 0, %s7, %s5
  $region1: #{gcn_forward.1} parent=0
    #allocation3 [shape = 'u8[131072]{0}', space=vmem, size = 0x20000, scoped, tag = 'input window, operand 0']
    loop: start=0, step=1, limit=6
    $region2: #{gcn_forward.1} parent=1 // loop_pre_header
      _
    $region3: #{gcn_forward.1} parent=1 // loop_header
      %s10 = sphi 0, %s14
      %p11 = scmp.ge.s32.totalorder %s10, 6
      %s17 = sphi 0, %s29
      %s18 = sphi 0, %s25
      %s19 = sphi 0, %s17
      %s20 = sphi 0, %s18
      %s21 = sphi 0, %s19
      %s22 = sphi 0, %s20
      %s34 = sphi 0, %s36
      %s37 = sphi 0, %s34
      %s38 = sphi 0, %s37
      %s54 = sphi 0, %s38
      %s58 = sphi 0, %s58
      %s60 = sphi 0, %s58
      %s61 = sphi 0, %s60
      %s75 = sphi 0, %s61
      %s81 = sphi 0, %s83
      %s84 = sphi 0, %s81
      %s85 = sphi 0, %s84
      %s101 = sphi 0, %s85
      %s105 = sphi 0, %s105
      %s107 = sphi 0, %s105
      %s108 = sphi 0, %s107
      %s122 = sphi 0, %s108
      %s128 = sphi 0, %s130
      %s131 = sphi 0, %s128
      %s132 = sphi 0, %s131
      %s148 = sphi 0, %s132
    $region4: #{gcn_forward.1} parent=1 // loop_header_branch
      %13 = sbr.rel (%p11) target = $region8
    $region5: #{gcn_forward.1} parent=1 // loop_body
      %s15 = ssub.s32 %s10, 1
      %s16 = ssub.s32 %s10, 2
      %s23 = sadd.s32 1, %s18
      %p24 = scmp.ge.s32.totalorder %s23, 2
      %s25 = scalar_select %p24, 0, %s23
      %s26 = sadd.s32 1, %s17
      %s27 = scalar_select %p24, %s26, %s17
      %p28 = scmp.ge.s32.totalorder %s27, 2
      %s29 = scalar_select %p28, 0, %s27
      %s30 = ssub.s32 %s17, %s29
      %s31 = ssub.s32 %s18, %s25
      %s32 = sor.u32 %s30, %s31
      %p33 = scmp.eq.s32.totalorder %s32, 0
      %s35 = sadd.s32 %s34, 1
      %s36 = scalar_select %p33, %s34, %s35
      %p39 = pneg %p33
      %p40 = scmp.eq.s32.totalorder %s10, 3
      %p41 = por %p39, %p40
      %p42 = scmp.ne.s32.totalorder %s34, %s37
      %p43 = scmp.eq.s32.totalorder %s10, 0
      %p44 = por %p42, %p43
      %p45 = scmp.ne.s32.totalorder %s34, %s37
      %p46 = scmp.eq.s32.totalorder %s15, 3
      %p47 = por %p45, %p46
      %p48 = scmp.ne.s32.totalorder %s37, %s38
      %p49 = scmp.eq.s32.totalorder %s15, 0
      %p50 = por %p48, %p49
      %p51 = scmp.ne.s32.totalorder %s37, %s38
      %p52 = scmp.eq.s32.totalorder %s16, 3
      %p53 = por %p51, %p52
      %p55 = scmp.ne.s32.totalorder %s38, %s54
      %p56 = scmp.eq.s32.totalorder %s16, 0
      %p57 = por %p55, %p56
      %s59 = sadd.s32 %s58, 1
      %p62 = scmp.eq.s32.totalorder %s10, 3
      %p63 = scmp.ne.s32.totalorder %s58, %s60
      %p64 = scmp.eq.s32.totalorder %s10, 0
      %p65 = por %p63, %p64
      %p66 = scmp.ne.s32.totalorder %s58, %s60
      %p67 = scmp.eq.s32.totalorder %s15, 3
      %p68 = por %p66, %p67
      %p69 = scmp.ne.s32.totalorder %s60, %s61
      %p70 = scmp.eq.s32.totalorder %s15, 0
      %p71 = por %p69, %p70
      %p72 = scmp.ne.s32.totalorder %s60, %s61
      %p73 = scmp.eq.s32.totalorder %s16, 3
      %p74 = por %p72, %p73
      %p76 = scmp.ne.s32.totalorder %s61, %s75
      %p77 = scmp.eq.s32.totalorder %s16, 0
      %p78 = por %p76, %p77
      %s79 = ssub.s32 %s17, %s29
      %p80 = scmp.eq.s32.totalorder %s79, 0
      %s82 = sadd.s32 %s81, 1
      %s83 = scalar_select %p80, %s81, %s82
      %p86 = pneg %p80
      %p87 = scmp.eq.s32.totalorder %s10, 3
      %p88 = por %p86, %p87
      %p89 = scmp.ne.s32.totalorder %s81, %s84
      %p90 = scmp.eq.s32.totalorder %s10, 0
      %p91 = por %p89, %p90
      %p92 = scmp.ne.s32.totalorder %s81, %s84
      %p93 = scmp.eq.s32.totalorder %s15, 3
      %p94 = por %p92, %p93
      %p95 = scmp.ne.s32.totalorder %s84, %s85
      %p96 = scmp.eq.s32.totalorder %s15, 0
      %p97 = por %p95, %p96
      %p98 = scmp.ne.s32.totalorder %s84, %s85
      %p99 = scmp.eq.s32.totalorder %s16, 3
      %p100 = por %p98, %p99
      %p102 = scmp.ne.s32.totalorder %s85, %s101
      %p103 = scmp.eq.s32.totalorder %s16, 0
      %p104 = por %p102, %p103
      %s106 = sadd.s32 %s105, 1
      %p109 = scmp.eq.s32.totalorder %s10, 3
      %p110 = scmp.ne.s32.totalorder %s105, %s107
      %p111 = scmp.eq.s32.totalorder %s10, 0
      %p112 = por %p110, %p111
      %p113 = scmp.ne.s32.totalorder %s105, %s107
      %p114 = scmp.eq.s32.totalorder %s15, 3
      %p115 = por %p113, %p114
      %p116 = scmp.ne.s32.totalorder %s107, %s108
      %p117 = scmp.eq.s32.totalorder %s15, 0
      %p118 = por %p116, %p117
      %p119 = scmp.ne.s32.totalorder %s107, %s108
      %p120 = scmp.eq.s32.totalorder %s16, 3
      %p121 = por %p119, %p120
      %p123 = scmp.ne.s32.totalorder %s108, %s122
      %p124 = scmp.eq.s32.totalorder %s16, 0
      %p125 = por %p123, %p124
      %s126 = ssub.s32 %s17, %s29
      %p127 = scmp.eq.s32.totalorder %s126, 0
      %s129 = sadd.s32 %s128, 1
      %s130 = scalar_select %p127, %s128, %s129
      %p133 = pneg %p127
      %p134 = scmp.eq.s32.totalorder %s10, 3
      %p135 = por %p133, %p134
      %p136 = scmp.ne.s32.totalorder %s128, %s131
      %p137 = scmp.eq.s32.totalorder %s10, 0
      %p138 = por %p136, %p137
      %p139 = scmp.ne.s32.totalorder %s128, %s131
      %p140 = scmp.eq.s32.totalorder %s15, 3
      %p141 = por %p139, %p140
      %p142 = scmp.ne.s32.totalorder %s131, %s132
      %p143 = scmp.eq.s32.totalorder %s15, 0
      %p144 = por %p142, %p143
      %p145 = scmp.ne.s32.totalorder %s131, %s132
      %p146 = scmp.eq.s32.totalorder %s16, 3
      %p147 = por %p145, %p146
      %p149 = scmp.ne.s32.totalorder %s132, %s148
      %p150 = scmp.eq.s32.totalorder %s16, 0
      %p151 = por %p149, %p150
      %p152 = scmp.le.s32.totalorder 1, %s10
      %p153 = scmp.lt.s32.totalorder %s10, 5
      %p154 = pnand %p152, %p153
      %p155 = pneg %p154
      // Predicated region
      $region9: #{gcn_forward.1} parent=5 // pred_check
        _
      $region10: #{gcn_forward.1} parent=5 // pred_check_branch
        %157 = sbr.rel (%p154) target = $region12
      $region11: #{gcn_forward.1} parent=5 // pred_region
        %s158 = ssub.s32 %s10, 1
        // Predicated region
        $region13: #{gcn_forward.1} parent=11 // pred_check
          %p159 = pneg %p71
        $region14: #{gcn_forward.1} parent=11 // pred_check_branch
          %161 = sbr.rel (%p159) target = $region16
        $region15: #{gcn_forward.1} parent=11 // pred_region
          _
        $region16: #{gcn_forward.1} parent=11 // pred_fallthru
          _
        // Predicated region
        $region17: #{gcn_forward.1} parent=11 // pred_check
          %p162 = pneg %p118
        $region18: #{gcn_forward.1} parent=11 // pred_check_branch
          %164 = sbr.rel (%p162) target = $region20
        $region19: #{gcn_forward.1} parent=11 // pred_region
          _
        $region20: #{gcn_forward.1} parent=11 // pred_fallthru
          _
      $region12: #{gcn_forward.1} parent=5 // pred_fallthru
        _
      %p165 = scmp.lt.s32.totalorder %s10, 4
      // Predicated region
      $region21: #{gcn_forward.1} parent=5 // pred_check
        %p166 = pneg %p165
      $region22: #{gcn_forward.1} parent=5 // pred_check_branch
        %168 = sbr.rel (%p166) target = $region24
      $region23: #{gcn_forward.1} parent=5 // pred_region
        // Predicated region
        $region25: #{gcn_forward.1} parent=23 // pred_check
          %p169 = pneg %p44
        $region26: #{gcn_forward.1} parent=23 // pred_check_branch
          %171 = sbr.rel (%p169) target = $region28
        $region27: #{gcn_forward.1} parent=23 // pred_region
          %s172 = sand.u32 %s34, 1
          %s173 = sand.u32 %s34, 1
          %s174 = smul.addr %s173, 128
          %s175 = scalar_lea.vmem [#allocation3], %s174
          %s176 = smul.u32 8, %s17
          %s177 = smul.u32 2, %s18
          %s178 = smul.addr %s176, 4
          %s179 = sadd.s32 %s177, %s178
          %s180 = smul.addr %s179, 8
          %s181 = scalar_lea.vmem %s0, %s180
          // Predicated region
          $region29: #{gcn_forward.1} parent=27 // pred_check
            _
          $region30: #{gcn_forward.1} parent=27 // pred_check_branch
            %183 = sbr.rel (0) target = $region32
          $region31: #{gcn_forward.1} parent=27 // pred_region
            // Predicated region
            $region33: #{gcn_forward.1} parent=31 // pred_check
              _
            $region34: #{gcn_forward.1} parent=31 // pred_check_branch
              %185 = sbr.rel (0) target = $region36
            $region35: #{gcn_forward.1} parent=31 // pred_region
              loop: start=0, step=1, limit=1
              $region37: #{gcn_forward.1} parent=35 // loop_pre_header
                _
              $region38: #{gcn_forward.1} parent=35 // loop_header
                %s187 = sphi 0, %s191
                %p188 = scmp.ge.s32.totalorder %s187, 1
                %s192 = sphi %s181, %s181
                %s193 = sphi %s175, %s175
              $region39: #{gcn_forward.1} parent=35 // loop_header_branch
                %190 = sbr.rel (%p188) target = $region43
              $region40: #{gcn_forward.1} parent=35 // loop_body
                %v194 = vld [vmem:[%s192] sm:$0xff]
                %195 = vst [vmem:[%s193] sm:$0xff] %v194
                %v196 = vld [vmem:[%s192 + $0x8] sm:$0xff]
                %197 = vst [vmem:[%s193 + $0x8] sm:$0xff] %v196
                %v198 = vld [vmem:[%s192 + $0x20] sm:$0xff]
                %199 = vst [vmem:[%s193 + $0x10] sm:$0xff] %v198
                %v200 = vld [vmem:[%s192 + $0x28] sm:$0xff]
                %201 = vst [vmem:[%s193 + $0x18] sm:$0xff] %v200
                %v202 = vld [vmem:[%s192 + $0x40] sm:$0xff]
                %203 = vst [vmem:[%s193 + $0x20] sm:$0xff] %v202
                %v204 = vld [vmem:[%s192 + $0x48] sm:$0xff]
                %205 = vst [vmem:[%s193 + $0x28] sm:$0xff] %v204
                %v206 = vld [vmem:[%s192 + $0x60] sm:$0xff]
                %207 = vst [vmem:[%s193 + $0x30] sm:$0xff] %v206
                %v208 = vld [vmem:[%s192 + $0x68] sm:$0xff]
                %209 = vst [vmem:[%s193 + $0x38] sm:$0xff] %v208
                %v210 = vld [vmem:[%s192 + $0x80] sm:$0xff]
                %211 = vst [vmem:[%s193 + $0x40] sm:$0xff] %v210
                %v212 = vld [vmem:[%s192 + $0x88] sm:$0xff]
                %213 = vst [vmem:[%s193 + $0x48] sm:$0xff] %v212
                %v214 = vld [vmem:[%s192 + $0xa0] sm:$0xff]
                %215 = vst [vmem:[%s193 + $0x50] sm:$0xff] %v214
                %v216 = vld [vmem:[%s192 + $0xa8] sm:$0xff]
                %217 = vst [vmem:[%s193 + $0x58] sm:$0xff] %v216
                %v218 = vld [vmem:[%s192 + $0xc0] sm:$0xff]
                %219 = vst [vmem:[%s193 + $0x60] sm:$0xff] %v218
                %v220 = vld [vmem:[%s192 + $0xc8] sm:$0xff]
                %221 = vst [vmem:[%s193 + $0x68] sm:$0xff] %v220
                %v222 = vld [vmem:[%s192 + $0xe0] sm:$0xff]
                %223 = vst [vmem:[%s193 + $0x70] sm:$0xff] %v222
                %v224 = vld [vmem:[%s192 + $0xe8] sm:$0xff]
                %225 = vst [vmem:[%s193 + $0x78] sm:$0xff] %v224
              $region41: #{gcn_forward.1} parent=35 // loop_footer
                %s191 = sadd.s32 1, %s187
              $region42: #{gcn_forward.1} parent=35 // loop_footer_branch
                %186 = sbr.rel target = $region38
              $region43: #{gcn_forward.1} parent=35 // loop_exit
                _
            $region36: #{gcn_forward.1} parent=31 // pred_fallthru
              _
            // Predicated region
            $region44: #{gcn_forward.1} parent=31 // pred_check
              _
            $region45: #{gcn_forward.1} parent=31 // pred_check_branch
              %227 = sbr.rel target = $region47
            $region46: #{gcn_forward.1} parent=31 // pred_region
              _
            $region47: #{gcn_forward.1} parent=31 // pred_fallthru
              _
          $region32: #{gcn_forward.1} parent=27 // pred_fallthru
            _
          %228 = vnop
        $region28: #{gcn_forward.1} parent=23 // pred_fallthru
          _
        // Predicated region
        $region48: #{gcn_forward.1} parent=23 // pred_check
          %p229 = pneg %p91
        $region49: #{gcn_forward.1} parent=23 // pred_check_branch
          %231 = sbr.rel (%p229) target = $region51
        $region50: #{gcn_forward.1} parent=23 // pred_region
          %s232 = smul.u32 32, %s17
          %p233 = scmp.lt.s32.totalorder %s232, 63
          %s234 = scalar_select %p233, %s232, 63
          %s235 = smul.addr %s234, 8
          %s236 = scalar_lea.vmem %s2, %s235
          %s237 = smul.u32 32, %s17
        $region51: #{gcn_forward.1} parent=23 // pred_fallthru
          _
      $region24: #{gcn_forward.1} parent=5 // pred_fallthru
        _
      %p238 = scmp.le.s32.totalorder 1, %s10
      %p239 = scmp.lt.s32.totalorder %s10, 5
      %p240 = pnand %p238, %p239
      %p241 = pneg %p240
      // Predicated region
      $region52: #{gcn_forward.1} parent=5 // pred_check
        _
      $region53: #{gcn_forward.1} parent=5 // pred_check_branch
        %243 = sbr.rel (%p240) target = $region55
      $region54: #{gcn_forward.1} parent=5 // pred_region
        %s244 = ssub.s32 %s10, 1
        %s245 = sand.u32 %s37, 1
        %s246 = sand.u32 %s37, 1
        %s247 = smul.addr %s246, 128
        %s248 = scalar_lea.vmem [#allocation3], %s247
        // Predicated region
        $region56: #{gcn_forward.1} parent=54 // pred_check
          %p249 = pneg %p50
        $region57: #{gcn_forward.1} parent=54 // pred_check_branch
          %251 = sbr.rel (%p249) target = $region59
        $region58: #{gcn_forward.1} parent=54 // pred_region
          _
        $region59: #{gcn_forward.1} parent=54 // pred_fallthru
          _
        %s252 = sand.u32 %s37, 1
        %s253 = sand.u32 %s37, 1
        %s254 = smul.addr %s253, 128
        %s255 = scalar_lea.vmem [#allocation3], %s254
        %p256 = pneg %p50
        %p257 = pneg %p47
        %p258 = pneg %p71
        %p259 = pneg %p68
        %s260 = smul.u32 32, %s19
        %p261 = scmp.lt.s32.totalorder %s260, 63
        %s262 = scalar_select %p261, %s260, 63
        %s263 = smul.addr %s262, 8
        %s264 = scalar_lea.vmem %s2, %s263
        %p265 = pneg %p97
        %p266 = pneg %p94
        %p267 = pneg %p118
        %p268 = pneg %p115
        %p269 = pneg %p144
        %p270 = pneg %p141
        %s271 = smul.u32 32, %s19
        %p272 = scmp.lt.s32.totalorder %s271, 63
        %s273 = scalar_select %p272, %s271, 63
        %s274 = smul.addr %s273, 8
        %s275 = scalar_lea.vmem %s4, %s274
        %s276 = smul.u32 8, %s19
        %s277 = smul.u32 2, %s20
        %s278 = smul.u32 32, %s19
        %p279 = scmp.lt.s32.totalorder %s278, 63
        %s280 = scalar_select %p279, %s278, 63
        %s281 = smul.addr %s280, 8
        %s282 = scalar_lea.vmem %s2, %s281
        %s283 = smul.u32 32, %s19
        %s284 = smul.u32 32, %s19
        %p285 = scmp.lt.s32.totalorder %s284, 63
        %s286 = scalar_select %p285, %s284, 63
        %s287 = smul.addr %s286, 8
        %s288 = scalar_lea.vmem %s4, %s287
        %s289 = smul.u32 32, %s19
        %p291 = scmp.eq.s32.totalorder %s20, 0
        // Predicated region
        $region60: #{gcn_forward.1} parent=54 // pred_check
          %p292 = pneg %p291
        $region61: #{gcn_forward.1} parent=54 // pred_check_branch
          %294 = sbr.rel (%p292) target = $region63
        $region62: #{gcn_forward.1} parent=54 // pred_region
          %295 = vst [vmem:[#allocation2] sm:$0xff] 0.0
          %296 = vst [vmem:[#allocation2 + $0x8] sm:$0xff] 0.0
          %297 = vst [vmem:[#allocation2 + $0x10] sm:$0xff] 0.0
          %298 = vst [vmem:[#allocation2 + $0x18] sm:$0xff] 0.0
          %299 = vst [vmem:[#allocation2 + $0x20] sm:$0xff] 0.0
          %300 = vst [vmem:[#allocation2 + $0x28] sm:$0xff] 0.0
          %301 = vst [vmem:[#allocation2 + $0x30] sm:$0xff] 0.0
          %302 = vst [vmem:[#allocation2 + $0x38] sm:$0xff] 0.0
          %303 = vst [vmem:[#allocation2 + $0x40] sm:$0xff] 0.0
          %304 = vst [vmem:[#allocation2 + $0x48] sm:$0xff] 0.0
          %305 = vst [vmem:[#allocation2 + $0x50] sm:$0xff] 0.0
          %306 = vst [vmem:[#allocation2 + $0x58] sm:$0xff] 0.0
          %307 = vst [vmem:[#allocation2 + $0x60] sm:$0xff] 0.0
          %308 = vst [vmem:[#allocation2 + $0x68] sm:$0xff] 0.0
          %309 = vst [vmem:[#allocation2 + $0x70] sm:$0xff] 0.0
          %310 = vst [vmem:[#allocation2 + $0x78] sm:$0xff] 0.0
          %311 = vst [vmem:[#allocation2 + $0x80] sm:$0xff] 0.0
          %312 = vst [vmem:[#allocation2 + $0x88] sm:$0xff] 0.0
          %313 = vst [vmem:[#allocation2 + $0x90] sm:$0xff] 0.0
          %314 = vst [vmem:[#allocation2 + $0x98] sm:$0xff] 0.0
          %315 = vst [vmem:[#allocation2 + $0xa0] sm:$0xff] 0.0
          %316 = vst [vmem:[#allocation2 + $0xa8] sm:$0xff] 0.0
          %317 = vst [vmem:[#allocation2 + $0xb0] sm:$0xff] 0.0
          %318 = vst [vmem:[#allocation2 + $0xb8] sm:$0xff] 0.0
          %319 = vst [vmem:[#allocation2 + $0xc0] sm:$0xff] 0.0
          %320 = vst [vmem:[#allocation2 + $0xc8] sm:$0xff] 0.0
          %321 = vst [vmem:[#allocation2 + $0xd0] sm:$0xff] 0.0
          %322 = vst [vmem:[#allocation2 + $0xd8] sm:$0xff] 0.0
          %323 = vst [vmem:[#allocation2 + $0xe0] sm:$0xff] 0.0
          %324 = vst [vmem:[#allocation2 + $0xe8] sm:$0xff] 0.0
          %325 = vst [vmem:[#allocation2 + $0xf0] sm:$0xff] 0.0
          %326 = vst [vmem:[#allocation2 + $0xf8] sm:$0xff] 0.0
        $region63: #{gcn_forward.1} parent=54 // pred_fallthru
          _
        %v327 = vld [vmem:[%s248] sm:$0xff]
        %v328 = vld [vmem:[%s248 + $0x8] sm:$0xff]
        %v329 = vld [vmem:[%s248 + $0x10] sm:$0xff]
        %v330 = vld [vmem:[%s248 + $0x18] sm:$0xff]
        %v331 = vld [vmem:[%s248 + $0x20] sm:$0xff]
        %v332 = vld [vmem:[%s248 + $0x28] sm:$0xff]
        %v333 = vld [vmem:[%s248 + $0x30] sm:$0xff]
        %v334 = vld [vmem:[%s248 + $0x38] sm:$0xff]
        %v335 = vld [vmem:[%s248 + $0x40] sm:$0xff]
        %v336 = vld [vmem:[%s248 + $0x48] sm:$0xff]
        %v337 = vld [vmem:[%s248 + $0x50] sm:$0xff]
        %v338 = vld [vmem:[%s248 + $0x58] sm:$0xff]
        %v339 = vld [vmem:[%s248 + $0x60] sm:$0xff]
        %v340 = vld [vmem:[%s248 + $0x68] sm:$0xff]
        %v341 = vld [vmem:[%s248 + $0x70] sm:$0xff]
        %v342 = vld [vmem:[%s248 + $0x78] sm:$0xff]
        %v343 = vunpack.c.l.s8.bf16 %v327
        %v344 = vunpack.c.l.s8.bf16 %v328
        %v345 = vunpack.c.h.s8.bf16 %v327
        %v346 = vunpack.c.h.s8.bf16 %v328
        %v347 = vunpack.c.l.s8.bf16 %v329
        %v348 = vunpack.c.l.s8.bf16 %v330
        %v349 = vunpack.c.h.s8.bf16 %v329
        %v350 = vunpack.c.h.s8.bf16 %v330
        %v351 = vunpack.c.l.s8.bf16 %v331
        %v352 = vunpack.c.l.s8.bf16 %v332
        %v353 = vunpack.c.h.s8.bf16 %v331
        %v354 = vunpack.c.h.s8.bf16 %v332
        %v355 = vunpack.c.l.s8.bf16 %v333
        %v356 = vunpack.c.l.s8.bf16 %v334
        %v357 = vunpack.c.h.s8.bf16 %v333
        %v358 = vunpack.c.h.s8.bf16 %v334
        %v359 = vunpack.c.l.s8.bf16 %v335
        %v360 = vunpack.c.l.s8.bf16 %v336
        %v361 = vunpack.c.h.s8.bf16 %v335
        %v362 = vunpack.c.h.s8.bf16 %v336
        %v363 = vunpack.c.l.s8.bf16 %v337
        %v364 = vunpack.c.l.s8.bf16 %v338
        %v365 = vunpack.c.h.s8.bf16 %v337
        %v366 = vunpack.c.h.s8.bf16 %v338
        %v367 = vunpack.c.l.s8.bf16 %v339
        %v368 = vunpack.c.l.s8.bf16 %v340
        %v369 = vunpack.c.h.s8.bf16 %v339
        %v370 = vunpack.c.h.s8.bf16 %v340
        %v371 = vunpack.c.l.s8.bf16 %v341
        %v372 = vunpack.c.l.s8.bf16 %v342
        %v373 = vunpack.c.h.s8.bf16 %v341
        %v374 = vunpack.c.h.s8.bf16 %v342
        %s375 = smul.u32 %s20, 256
        %s376 = sshra.s32 %s375, 3
        %s377 = sand.u32 %s375, 7
        %s378 = smul.addr %s376, 4
        %s379 = scalar_lea.vmem %s1, %s378
        %v380 = vld [vmem:[%s379] sm:$0xf]
        %v381 = vld [vmem:[%s379 + $0x4] sm:$0xf]
        %v382 = vld [vmem:[%s379 + $0x8] sm:$0xf]
        %v383 = vld [vmem:[%s379 + $0xc] sm:$0xf]
        %v384 = vld [vmem:[%s379 + $0x10] sm:$0xf]
        %v385 = vld [vmem:[%s379 + $0x14] sm:$0xf]
        %v386 = vld [vmem:[%s379 + $0x18] sm:$0xf]
        %v387 = vld [vmem:[%s379 + $0x1c] sm:$0xf]
        %v388 = vld [vmem:[%s379 + $0x20] sm:$0xf]
        %v389 = vld [vmem:[%s379 + $0x24] sm:$0xf]
        %v390 = vld [vmem:[%s379 + $0x28] sm:$0xf]
        %v391 = vld [vmem:[%s379 + $0x2c] sm:$0xf]
        %v392 = vld [vmem:[%s379 + $0x30] sm:$0xf]
        %v393 = vld [vmem:[%s379 + $0x34] sm:$0xf]
        %v394 = vld [vmem:[%s379 + $0x38] sm:$0xf]
        %v395 = vld [vmem:[%s379 + $0x3c] sm:$0xf]
        %v396 = vld [vmem:[%s379 + $0x40] sm:$0xf]
        %v397 = vld [vmem:[%s379 + $0x44] sm:$0xf]
        %v398 = vld [vmem:[%s379 + $0x48] sm:$0xf]
        %v399 = vld [vmem:[%s379 + $0x4c] sm:$0xf]
        %v400 = vld [vmem:[%s379 + $0x50] sm:$0xf]
        %v401 = vld [vmem:[%s379 + $0x54] sm:$0xf]
        %v402 = vld [vmem:[%s379 + $0x58] sm:$0xf]
        %v403 = vld [vmem:[%s379 + $0x5c] sm:$0xf]
        %v404 = vld [vmem:[%s379 + $0x60] sm:$0xf]
        %v405 = vld [vmem:[%s379 + $0x64] sm:$0xf]
        %v406 = vld [vmem:[%s379 + $0x68] sm:$0xf]
        %v407 = vld [vmem:[%s379 + $0x6c] sm:$0xf]
        %v408 = vld [vmem:[%s379 + $0x70] sm:$0xf]
        %v409 = vld [vmem:[%s379 + $0x74] sm:$0xf]
        %v410 = vld [vmem:[%s379 + $0x78] sm:$0xf]
        %v411 = vld [vmem:[%s379 + $0x7c] sm:$0xf]
        %v412 = vld [vmem:[#allocation2] sm:$0xff]
        %v413 = vld [vmem:[#allocation2 + $0x8] sm:$0xff]
        %v414 = vld [vmem:[#allocation2 + $0x10] sm:$0xff]
        %v415 = vld [vmem:[#allocation2 + $0x18] sm:$0xff]
        %v416 = vld [vmem:[#allocation2 + $0x20] sm:$0xff]
        %v417 = vld [vmem:[#allocation2 + $0x28] sm:$0xff]
        %v418 = vld [vmem:[#allocation2 + $0x30] sm:$0xff]
        %v419 = vld [vmem:[#allocation2 + $0x38] sm:$0xff]
        %v420 = vld [vmem:[#allocation2 + $0x40] sm:$0xff]
        %v421 = vld [vmem:[#allocation2 + $0x48] sm:$0xff]
        %v422 = vld [vmem:[#allocation2 + $0x50] sm:$0xff]
        %v423 = vld [vmem:[#allocation2 + $0x58] sm:$0xff]
        %v424 = vld [vmem:[#allocation2 + $0x60] sm:$0xff]
        %v425 = vld [vmem:[#allocation2 + $0x68] sm:$0xff]
        %v426 = vld [vmem:[#allocation2 + $0x70] sm:$0xff]
        %v427 = vld [vmem:[#allocation2 + $0x78] sm:$0xff]
        %v428 = vld [vmem:[#allocation2 + $0x80] sm:$0xff]
        %v429 = vld [vmem:[#allocation2 + $0x88] sm:$0xff]
        %v430 = vld [vmem:[#allocation2 + $0x90] sm:$0xff]
        %v431 = vld [vmem:[#allocation2 + $0x98] sm:$0xff]
        %v432 = vld [vmem:[#allocation2 + $0xa0] sm:$0xff]
        %v433 = vld [vmem:[#allocation2 + $0xa8] sm:$0xff]
        %v434 = vld [vmem:[#allocation2 + $0xb0] sm:$0xff]
        %v435 = vld [vmem:[#allocation2 + $0xb8] sm:$0xff]
        %v436 = vld [vmem:[#allocation2 + $0xc0] sm:$0xff]
        %v437 = vld [vmem:[#allocation2 + $0xc8] sm:$0xff]
        %v438 = vld [vmem:[#allocation2 + $0xd0] sm:$0xff]
        %v439 = vld [vmem:[#allocation2 + $0xd8] sm:$0xff]
        %v440 = vld [vmem:[#allocation2 + $0xe0] sm:$0xff]
        %v441 = vld [vmem:[#allocation2 + $0xe8] sm:$0xff]
        %v442 = vld [vmem:[#allocation2 + $0xf0] sm:$0xff]
        %v443 = vld [vmem:[#allocation2 + $0xf8] sm:$0xff]
        %v476 = vunpack.c.l.b16 %v380
        %v477 = vunpack.c.l.b16 %v381
        %v478 = vunpack.c.l.b16 %v382
        %v479 = vunpack.c.l.b16 %v383
        %v480 = vunpack.c.l.b16 %v384
        %v481 = vunpack.c.l.b16 %v385
        %v482 = vunpack.c.l.b16 %v386
        %v483 = vunpack.c.l.b16 %v387
        %v484 = vunpack.c.l.b16 %v388
        %v485 = vunpack.c.l.b16 %v389
        %v486 = vunpack.c.l.b16 %v390
        %v487 = vunpack.c.l.b16 %v391
        %v488 = vunpack.c.l.b16 %v392
        %v489 = vunpack.c.l.b16 %v393
        %v490 = vunpack.c.l.b16 %v394
        %v491 = vunpack.c.l.b16 %v395
        %v492 = vunpack.c.l.b16 %v396
        %v493 = vunpack.c.l.b16 %v397
        %v494 = vunpack.c.l.b16 %v398
        %v495 = vunpack.c.l.b16 %v399
        %v496 = vunpack.c.l.b16 %v400
        %v497 = vunpack.c.l.b16 %v401
        %v498 = vunpack.c.l.b16 %v402
        %v499 = vunpack.c.l.b16 %v403
        %v500 = vunpack.c.l.b16 %v404
        %v501 = vunpack.c.l.b16 %v405
        %v502 = vunpack.c.l.b16 %v406
        %v503 = vunpack.c.l.b16 %v407
        %v504 = vunpack.c.l.b16 %v408
        %v505 = vunpack.c.l.b16 %v409
        %v506 = vunpack.c.l.b16 %v410
        %v507 = vunpack.c.l.b16 %v411
        %v508 = vpack.c.b16 %v477, %v476
        %v509 = vpack.c.b16 %v479, %v478
        %v510 = vpack.c.b16 %v481, %v480
        %v511 = vpack.c.b16 %v483, %v482
        %v512 = vpack.c.b16 %v485, %v484
        %v513 = vpack.c.b16 %v487, %v486
        %v514 = vpack.c.b16 %v489, %v488
        %v515 = vpack.c.b16 %v491, %v490
        %v516 = vpack.c.b16 %v493, %v492
        %v517 = vpack.c.b16 %v495, %v494
        %v518 = vpack.c.b16 %v497, %v496
        %v519 = vpack.c.b16 %v499, %v498
        %v520 = vpack.c.b16 %v501, %v500
        %v521 = vpack.c.b16 %v503, %v502
        %v522 = vpack.c.b16 %v505, %v504
        %v523 = vpack.c.b16 %v507, %v506
        %540 = vmatprep.subr.bf16.mxu0 0
        %541 = vmatpush1.bf16.msra.mxu0 %v515
        %542 = vmatprep.subr.bf16.mxu0 0
        %543 = vmatpush1.bf16.msra.mxu0 %v514
        %544 = vmatprep.subr.bf16.mxu0 0
        %545 = vmatpush1.bf16.msra.mxu0 %v513
        %546 = vmatprep.subr.bf16.mxu0 0
        %547 = vmatpush1.bf16.msra.mxu0 %v512
        %548 = vmatprep.subr.bf16.mxu0 0
        %549 = vmatpush1.bf16.msra.mxu0 %v511
        %550 = vmatprep.subr.bf16.mxu0 0
        %551 = vmatpush1.bf16.msra.mxu0 %v510
        %552 = vmatprep.subr.bf16.mxu0 0
        %553 = vmatpush1.bf16.msra.mxu0 %v509
        %554 = vmatprep.subr.bf16.mxu0 0
        %555 = vmatpush1.bf16.msra.mxu0 %v508
        %556 = vmatprep.subr.bf16.mxu0 0
        %557 = vmatpush2.bf16.msra.mxu0 %v523
        %558 = vmatprep.subr.bf16.mxu0 0
        %559 = vmatpush2.bf16.msra.mxu0 %v522
        %560 = vmatprep.subr.bf16.mxu0 0
        %561 = vmatpush2.bf16.msra.mxu0 %v521
        %562 = vmatprep.subr.bf16.mxu0 0
        %563 = vmatpush2.bf16.msra.mxu0 %v520
        %564 = vmatprep.subr.bf16.mxu0 0
        %565 = vmatpush2.bf16.msra.mxu0 %v519
        %566 = vmatprep.subr.bf16.mxu0 0
        %567 = vmatpush2.bf16.msra.mxu0 %v518
        %568 = vmatprep.subr.bf16.mxu0 0
        %569 = vmatpush2.bf16.msra.mxu0 %v517
        %570 = vmatprep.subr.bf16.mxu0 0
        %571 = vmatpush2.bf16.msra.mxu0 %v516
        %572 = vmatprep.mubr.bf16.mxu0 %v344
        %573 = vmatmul.mubr.bf16.gmra.mxu0 %v343
        %v574 = vpop.f32.mrf.mxu0
        %v575 = vadd.f32 0.0, %v574
        %v576 = vpop.f32.mrf.mxu0
        %v577 = vpop.f32.mrf.mxu0
        %v578 = vadd.f32 0.0, %v577
        %v579 = vpop.f32.mrf.mxu0
        %580 = vmatprep.mubr.bf16.mxu0 %v346
        %581 = vmatmul.mubr.bf16.gmra.mxu0 %v345
        %v582 = vpop.f32.mrf.mxu0
        %v583 = vadd.f32 0.0, %v582
        %v584 = vpop.f32.mrf.mxu0
        %v585 = vpop.f32.mrf.mxu0
        %v586 = vadd.f32 0.0, %v585
        %v587 = vpop.f32.mrf.mxu0
        %588 = vmatprep.mubr.bf16.mxu0 %v348
        %589 = vmatmul.mubr.bf16.gmra.mxu0 %v347
        %v590 = vpop.f32.mrf.mxu0
        %v591 = vadd.f32 0.0, %v590
        %v592 = vpop.f32.mrf.mxu0
        %v593 = vpop.f32.mrf.mxu0
        %v594 = vadd.f32 0.0, %v593
        %v595 = vpop.f32.mrf.mxu0
        %596 = vmatprep.mubr.bf16.mxu0 %v350
        %597 = vmatmul.mubr.bf16.gmra.mxu0 %v349
        %v598 = vpop.f32.mrf.mxu0
        %v599 = vadd.f32 0.0, %v598
        %v600 = vpop.f32.mrf.mxu0
        %v601 = vpop.f32.mrf.mxu0
        %v602 = vadd.f32 0.0, %v601
        %v603 = vpop.f32.mrf.mxu0
        %604 = vmatprep.mubr.bf16.mxu0 %v352
        %605 = vmatmul.mubr.bf16.gmra.mxu0 %v351
        %v606 = vpop.f32.mrf.mxu0
        %v607 = vadd.f32 0.0, %v606
        %v608 = vpop.f32.mrf.mxu0
        %v609 = vpop.f32.mrf.mxu0
        %v610 = vadd.f32 0.0, %v609
        %v611 = vpop.f32.mrf.mxu0
        %612 = vmatprep.mubr.bf16.mxu0 %v354
        %613 = vmatmul.mubr.bf16.gmra.mxu0 %v353
        %v614 = vpop.f32.mrf.mxu0
        %v615 = vadd.f32 0.0, %v614
        %v616 = vpop.f32.mrf.mxu0
        %v617 = vpop.f32.mrf.mxu0
        %v618 = vadd.f32 0.0, %v617
        %v619 = vpop.f32.mrf.mxu0
        %620 = vmatprep.mubr.bf16.mxu0 %v356
        %621 = vmatmul.mubr.bf16.gmra.mxu0 %v355
        %v622 = vpop.f32.mrf.mxu0
        %v623 = vadd.f32 0.0, %v622
        %v624 = vpop.f32.mrf.mxu0
        %v625 = vpop.f32.mrf.mxu0
        %v626 = vadd.f32 0.0, %v625
        %v627 = vpop.f32.mrf.mxu0
        %628 = vmatprep.mubr.bf16.mxu0 %v358
        %629 = vmatmul.mubr.bf16.gmra.mxu0 %v357
        %v630 = vpop.f32.mrf.mxu0
        %v631 = vadd.f32 0.0, %v630
        %v632 = vpop.f32.mrf.mxu0
        %v633 = vpop.f32.mrf.mxu0
        %v634 = vadd.f32 0.0, %v633
        %v635 = vpop.f32.mrf.mxu0
        %636 = vmatprep.mubr.bf16.mxu0 %v360
        %637 = vmatmul.mubr.bf16.gmra.mxu0 %v359
        %v638 = vpop.f32.mrf.mxu0
        %v639 = vadd.f32 0.0, %v638
        %v640 = vpop.f32.mrf.mxu0
        %v641 = vpop.f32.mrf.mxu0
        %v642 = vadd.f32 0.0, %v641
        %v643 = vpop.f32.mrf.mxu0
        %644 = vmatprep.mubr.bf16.mxu0 %v362
        %645 = vmatmul.mubr.bf16.gmra.mxu0 %v361
        %v646 = vpop.f32.mrf.mxu0
        %v647 = vadd.f32 0.0, %v646
        %v648 = vpop.f32.mrf.mxu0
        %v649 = vpop.f32.mrf.mxu0
        %v650 = vadd.f32 0.0, %v649
        %v651 = vpop.f32.mrf.mxu0
        %652 = vmatprep.mubr.bf16.mxu0 %v364
        %653 = vmatmul.mubr.bf16.gmra.mxu0 %v363
        %v654 = vpop.f32.mrf.mxu0
        %v655 = vadd.f32 0.0, %v654
        %v656 = vpop.f32.mrf.mxu0
        %v657 = vpop.f32.mrf.mxu0
        %v658 = vadd.f32 0.0, %v657
        %v659 = vpop.f32.mrf.mxu0
        %660 = vmatprep.mubr.bf16.mxu0 %v366
        %661 = vmatmul.mubr.bf16.gmra.mxu0 %v365
        %v662 = vpop.f32.mrf.mxu0
        %v663 = vadd.f32 0.0, %v662
        %v664 = vpop.f32.mrf.mxu0
        %v665 = vpop.f32.mrf.mxu0
        %v666 = vadd.f32 0.0, %v665
        %v667 = vpop.f32.mrf.mxu0
        %668 = vmatprep.mubr.bf16.mxu0 %v368
        %669 = vmatmul.mubr.bf16.gmra.mxu0 %v367
        %v670 = vpop.f32.mrf.mxu0
        %v671 = vadd.f32 0.0, %v670
        %v672 = vpop.f32.mrf.mxu0
        %v673 = vpop.f32.mrf.mxu0
        %v674 = vadd.f32 0.0, %v673
        %v675 = vpop.f32.mrf.mxu0
        %676 = vmatprep.mubr.bf16.mxu0 %v370
        %677 = vmatmul.mubr.bf16.gmra.mxu0 %v369
        %v678 = vpop.f32.mrf.mxu0
        %v679 = vadd.f32 0.0, %v678
        %v680 = vpop.f32.mrf.mxu0
        %v681 = vpop.f32.mrf.mxu0
        %v682 = vadd.f32 0.0, %v681
        %v683 = vpop.f32.mrf.mxu0
        %684 = vmatprep.mubr.bf16.mxu0 %v372
        %685 = vmatmul.mubr.bf16.gmra.mxu0 %v371
        %v686 = vpop.f32.mrf.mxu0
        %v687 = vadd.f32 0.0, %v686
        %v688 = vpop.f32.mrf.mxu0
        %v689 = vpop.f32.mrf.mxu0
        %v690 = vadd.f32 0.0, %v689
        %v691 = vpop.f32.mrf.mxu0
        %692 = vmatprep.mubr.bf16.mxu0 %v374
        %693 = vmatmul.mubr.bf16.gmra.mxu0 %v373
        %v694 = vpop.f32.mrf.mxu0
        %v695 = vadd.f32 0.0, %v694
        %v696 = vpop.f32.mrf.mxu0
        %v697 = vpop.f32.mrf.mxu0
        %v698 = vadd.f32 0.0, %v697
        %v699 = vpop.f32.mrf.mxu0
        %700 = vdwg.mxu0
        %v701 = vadd.f32 %v412, %v575
        %v702 = vadd.f32 %v413, %v578
        %v703 = vadd.f32 %v414, %v583
        %v704 = vadd.f32 %v415, %v586
        %v705 = vadd.f32 %v416, %v591
        %v706 = vadd.f32 %v417, %v594
        %v707 = vadd.f32 %v418, %v599
        %v708 = vadd.f32 %v419, %v602
        %v709 = vadd.f32 %v420, %v607
        %v710 = vadd.f32 %v421, %v610
        %v711 = vadd.f32 %v422, %v615
        %v712 = vadd.f32 %v423, %v618
        %v713 = vadd.f32 %v424, %v623
        %v714 = vadd.f32 %v425, %v626
        %v715 = vadd.f32 %v426, %v631
        %v716 = vadd.f32 %v427, %v634
        %v717 = vadd.f32 %v428, %v639
        %v718 = vadd.f32 %v429, %v642
        %v719 = vadd.f32 %v430, %v647
        %v720 = vadd.f32 %v431, %v650
        %v721 = vadd.f32 %v432, %v655
        %v722 = vadd.f32 %v433, %v658
        %v723 = vadd.f32 %v434, %v663
        %v724 = vadd.f32 %v435, %v666
        %v725 = vadd.f32 %v436, %v671
        %v726 = vadd.f32 %v437, %v674
        %v727 = vadd.f32 %v438, %v679
        %v728 = vadd.f32 %v439, %v682
        %v729 = vadd.f32 %v440, %v687
        %v730 = vadd.f32 %v441, %v690
        %v731 = vadd.f32 %v442, %v695
        %v732 = vadd.f32 %v443, %v698
        %733 = vst [vmem:[#allocation2] sm:$0xff] %v701
        %734 = vst [vmem:[#allocation2 + $0x8] sm:$0xff] %v702
        %735 = vst [vmem:[#allocation2 + $0x10] sm:$0xff] %v703
        %736 = vst [vmem:[#allocation2 + $0x18] sm:$0xff] %v704
        %737 = vst [vmem:[#allocation2 + $0x20] sm:$0xff] %v705
        %738 = vst [vmem:[#allocation2 + $0x28] sm:$0xff] %v706
        %739 = vst [vmem:[#allocation2 + $0x30] sm:$0xff] %v707
        %740 = vst [vmem:[#allocation2 + $0x38] sm:$0xff] %v708
        %741 = vst [vmem:[#allocation2 + $0x40] sm:$0xff] %v709
        %742 = vst [vmem:[#allocation2 + $0x48] sm:$0xff] %v710
        %743 = vst [vmem:[#allocation2 + $0x50] sm:$0xff] %v711
        %744 = vst [vmem:[#allocation2 + $0x58] sm:$0xff] %v712
        %745 = vst [vmem:[#allocation2 + $0x60] sm:$0xff] %v713
        %746 = vst [vmem:[#allocation2 + $0x68] sm:$0xff] %v714
        %747 = vst [vmem:[#allocation2 + $0x70] sm:$0xff] %v715
        %748 = vst [vmem:[#allocation2 + $0x78] sm:$0xff] %v716
        %749 = vst [vmem:[#allocation2 + $0x80] sm:$0xff] %v717
        %750 = vst [vmem:[#allocation2 + $0x88] sm:$0xff] %v718
        %751 = vst [vmem:[#allocation2 + $0x90] sm:$0xff] %v719
        %752 = vst [vmem:[#allocation2 + $0x98] sm:$0xff] %v720
        %753 = vst [vmem:[#allocation2 + $0xa0] sm:$0xff] %v721
        %754 = vst [vmem:[#allocation2 + $0xa8] sm:$0xff] %v722
        %755 = vst [vmem:[#allocation2 + $0xb0] sm:$0xff] %v723
        %756 = vst [vmem:[#allocation2 + $0xb8] sm:$0xff] %v724
        %757 = vst [vmem:[#allocation2 + $0xc0] sm:$0xff] %v725
        %758 = vst [vmem:[#allocation2 + $0xc8] sm:$0xff] %v726
        %759 = vst [vmem:[#allocation2 + $0xd0] sm:$0xff] %v727
        %760 = vst [vmem:[#allocation2 + $0xd8] sm:$0xff] %v728
        %761 = vst [vmem:[#allocation2 + $0xe0] sm:$0xff] %v729
        %762 = vst [vmem:[#allocation2 + $0xe8] sm:$0xff] %v730
        %763 = vst [vmem:[#allocation2 + $0xf0] sm:$0xff] %v731
        %764 = vst [vmem:[#allocation2 + $0xf8] sm:$0xff] %v732
        %p765 = scmp.eq.s32.totalorder %s20, 1
        // Predicated region
        $region64: #{gcn_forward.1} parent=54 // pred_check
          %p766 = pneg %p765
        $region65: #{gcn_forward.1} parent=54 // pred_check_branch
          %768 = sbr.rel (%p766) target = $region67
        $region66: #{gcn_forward.1} parent=54 // pred_region
          %v769 = vld [vmem:[#allocation2] sm:$0xff]
          %v770 = vld [vmem:[#allocation2 + $0x8] sm:$0xff]
          %v771 = vld [vmem:[#allocation2 + $0x10] sm:$0xff]
          %v772 = vld [vmem:[#allocation2 + $0x18] sm:$0xff]
          %v773 = vld [vmem:[#allocation2 + $0x20] sm:$0xff]
          %v774 = vld [vmem:[#allocation2 + $0x28] sm:$0xff]
          %v775 = vld [vmem:[#allocation2 + $0x30] sm:$0xff]
          %v776 = vld [vmem:[#allocation2 + $0x38] sm:$0xff]
          %v777 = vld [vmem:[#allocation2 + $0x40] sm:$0xff]
          %v778 = vld [vmem:[#allocation2 + $0x48] sm:$0xff]
          %v779 = vld [vmem:[#allocation2 + $0x50] sm:$0xff]
          %v780 = vld [vmem:[#allocation2 + $0x58] sm:$0xff]
          %v781 = vld [vmem:[#allocation2 + $0x60] sm:$0xff]
          %v782 = vld [vmem:[#allocation2 + $0x68] sm:$0xff]
          %v783 = vld [vmem:[#allocation2 + $0x70] sm:$0xff]
          %v784 = vld [vmem:[#allocation2 + $0x78] sm:$0xff]
          %v785 = vld [vmem:[#allocation2 + $0x80] sm:$0xff]
          %v786 = vld [vmem:[#allocation2 + $0x88] sm:$0xff]
          %v787 = vld [vmem:[#allocation2 + $0x90] sm:$0xff]
          %v788 = vld [vmem:[#allocation2 + $0x98] sm:$0xff]
          %v789 = vld [vmem:[#allocation2 + $0xa0] sm:$0xff]
          %v790 = vld [vmem:[#allocation2 + $0xa8] sm:$0xff]
          %v791 = vld [vmem:[#allocation2 + $0xb0] sm:$0xff]
          %v792 = vld [vmem:[#allocation2 + $0xb8] sm:$0xff]
          %v793 = vld [vmem:[#allocation2 + $0xc0] sm:$0xff]
          %v794 = vld [vmem:[#allocation2 + $0xc8] sm:$0xff]
          %v795 = vld [vmem:[#allocation2 + $0xd0] sm:$0xff]
          %v796 = vld [vmem:[#allocation2 + $0xd8] sm:$0xff]
          %v797 = vld [vmem:[#allocation2 + $0xe0] sm:$0xff]
          %v798 = vld [vmem:[#allocation2 + $0xe8] sm:$0xff]
          %v799 = vld [vmem:[#allocation2 + $0xf0] sm:$0xff]
          %v800 = vld [vmem:[#allocation2 + $0xf8] sm:$0xff]
          %v801 = vld [vmem:[%s282] sm:$0xff]
          %v802 = vld [vmem:[%s282 + $0x8] sm:$0xff]
          %v803 = vld [vmem:[%s282 + $0x10] sm:$0xff]
          %v804 = vld [vmem:[%s282 + $0x18] sm:$0xff]
          %v805 = vld [vmem:[%s282 + $0x20] sm:$0xff]
          %v806 = vld [vmem:[%s282 + $0x28] sm:$0xff]
          %v807 = vld [vmem:[%s282 + $0x30] sm:$0xff]
          %v808 = vld [vmem:[%s282 + $0x38] sm:$0xff]
          %v809 = vld [vmem:[%s282 + $0x40] sm:$0xff]
          %v810 = vld [vmem:[%s282 + $0x48] sm:$0xff]
          %v811 = vld [vmem:[%s282 + $0x50] sm:$0xff]
          %v812 = vld [vmem:[%s282 + $0x58] sm:$0xff]
          %v813 = vld [vmem:[%s282 + $0x60] sm:$0xff]
          %v814 = vld [vmem:[%s282 + $0x68] sm:$0xff]
          %v815 = vld [vmem:[%s282 + $0x70] sm:$0xff]
          %v816 = vld [vmem:[%s282 + $0x78] sm:$0xff]
          %v817 = vld [vmem:[%s282 + $0x80] sm:$0xff]
          %v818 = vld [vmem:[%s282 + $0x88] sm:$0xff]
          %v819 = vld [vmem:[%s282 + $0x90] sm:$0xff]
          %v820 = vld [vmem:[%s282 + $0x98] sm:$0xff]
          %v821 = vld [vmem:[%s282 + $0xa0] sm:$0xff]
          %v822 = vld [vmem:[%s282 + $0xa8] sm:$0xff]
          %v823 = vld [vmem:[%s282 + $0xb0] sm:$0xff]
          %v824 = vld [vmem:[%s282 + $0xb8] sm:$0xff]
          %v825 = vld [vmem:[%s282 + $0xc0] sm:$0xff]
          %v826 = vld [vmem:[%s282 + $0xc8] sm:$0xff]
          %v827 = vld [vmem:[%s282 + $0xd0] sm:$0xff]
          %v828 = vld [vmem:[%s282 + $0xd8] sm:$0xff]
          %v829 = vld [vmem:[%s282 + $0xe0] sm:$0xff]
          %v830 = vld [vmem:[%s282 + $0xe8] sm:$0xff]
          %v831 = vld [vmem:[%s282 + $0xf0] sm:$0xff]
          %v832 = vld [vmem:[%s282 + $0xf8] sm:$0xff]
          %834 = vset.pattern.permute.xlu0 0
          %835 = vperm.xlu0 %834, %v801
          %v836 = vpop.permute.xlu0 %835
          %839 = vset.pattern.permute.xlu0 0
          %840 = vperm.xlu0 %839, %v802
          %v841 = vpop.permute.xlu0 %840
          %844 = vset.pattern.permute.xlu0 0
          %845 = vperm.xlu0 %844, %v803
          %v846 = vpop.permute.xlu0 %845
          %849 = vset.pattern.permute.xlu0 0
          %850 = vperm.xlu0 %849, %v804
          %v851 = vpop.permute.xlu0 %850
          %854 = vset.pattern.permute.xlu0 0
          %855 = vperm.xlu0 %854, %v805
          %v856 = vpop.permute.xlu0 %855
          %859 = vset.pattern.permute.xlu0 0
          %860 = vperm.xlu0 %859, %v806
          %v861 = vpop.permute.xlu0 %860
          %864 = vset.pattern.permute.xlu0 0
          %865 = vperm.xlu0 %864, %v807
          %v866 = vpop.permute.xlu0 %865
          %869 = vset.pattern.permute.xlu0 0
          %870 = vperm.xlu0 %869, %v808
          %v871 = vpop.permute.xlu0 %870
          %874 = vset.pattern.permute.xlu0 0
          %875 = vperm.xlu0 %874, %v809
          %v876 = vpop.permute.xlu0 %875
          %879 = vset.pattern.permute.xlu0 0
          %880 = vperm.xlu0 %879, %v810
          %v881 = vpop.permute.xlu0 %880
          %884 = vset.pattern.permute.xlu0 0
          %885 = vperm.xlu0 %884, %v811
          %v886 = vpop.permute.xlu0 %885
          %889 = vset.pattern.permute.xlu0 0
          %890 = vperm.xlu0 %889, %v812
          %v891 = vpop.permute.xlu0 %890
          %894 = vset.pattern.permute.xlu0 0
          %895 = vperm.xlu0 %894, %v813
          %v896 = vpop.permute.xlu0 %895
          %899 = vset.pattern.permute.xlu0 0
          %900 = vperm.xlu0 %899, %v814
          %v901 = vpop.permute.xlu0 %900
          %904 = vset.pattern.permute.xlu0 0
          %905 = vperm.xlu0 %904, %v815
          %v906 = vpop.permute.xlu0 %905
          %909 = vset.pattern.permute.xlu0 0
          %910 = vperm.xlu0 %909, %v816
          %v911 = vpop.permute.xlu0 %910
          %914 = vset.pattern.permute.xlu0 0
          %915 = vperm.xlu0 %914, %v817
          %v916 = vpop.permute.xlu0 %915
          %919 = vset.pattern.permute.xlu0 0
          %920 = vperm.xlu0 %919, %v818
          %v921 = vpop.permute.xlu0 %920
          %924 = vset.pattern.permute.xlu0 0
          %925 = vperm.xlu0 %924, %v819
          %v926 = vpop.permute.xlu0 %925
          %929 = vset.pattern.permute.xlu0 0
          %930 = vperm.xlu0 %929, %v820
          %v931 = vpop.permute.xlu0 %930
          %934 = vset.pattern.permute.xlu0 0
          %935 = vperm.xlu0 %934, %v821
          %v936 = vpop.permute.xlu0 %935
          %939 = vset.pattern.permute.xlu0 0
          %940 = vperm.xlu0 %939, %v822
          %v941 = vpop.permute.xlu0 %940
          %944 = vset.pattern.permute.xlu0 0
          %945 = vperm.xlu0 %944, %v823
          %v946 = vpop.permute.xlu0 %945
          %949 = vset.pattern.permute.xlu0 0
          %950 = vperm.xlu0 %949, %v824
          %v951 = vpop.permute.xlu0 %950
          %954 = vset.pattern.permute.xlu0 0
          %955 = vperm.xlu0 %954, %v825
          %v956 = vpop.permute.xlu0 %955
          %959 = vset.pattern.permute.xlu0 0
          %960 = vperm.xlu0 %959, %v826
          %v961 = vpop.permute.xlu0 %960
          %964 = vset.pattern.permute.xlu0 0
          %965 = vperm.xlu0 %964, %v827
          %v966 = vpop.permute.xlu0 %965
          %969 = vset.pattern.permute.xlu0 0
          %970 = vperm.xlu0 %969, %v828
          %v971 = vpop.permute.xlu0 %970
          %974 = vset.pattern.permute.xlu0 0
          %975 = vperm.xlu0 %974, %v829
          %v976 = vpop.permute.xlu0 %975
          %979 = vset.pattern.permute.xlu0 0
          %980 = vperm.xlu0 %979, %v830
          %v981 = vpop.permute.xlu0 %980
          %984 = vset.pattern.permute.xlu0 0
          %985 = vperm.xlu0 %984, %v831
          %v986 = vpop.permute.xlu0 %985
          %989 = vset.pattern.permute.xlu0 0
          %990 = vperm.xlu0 %989, %v832
          %v991 = vpop.permute.xlu0 %990
          %v993 = vmul.f32 %v769, %v836
          %v994 = vmul.f32 %v770, %v841
          %v995 = vmul.f32 %v771, %v846
          %v996 = vmul.f32 %v772, %v851
          %v997 = vmul.f32 %v773, %v856
          %v998 = vmul.f32 %v774, %v861
          %v999 = vmul.f32 %v775, %v866
          %v1000 = vmul.f32 %v776, %v871
          %v1001 = vmul.f32 %v777, %v876
          %v1002 = vmul.f32 %v778, %v881
          %v1003 = vmul.f32 %v779, %v886
          %v1004 = vmul.f32 %v780, %v891
          %v1005 = vmul.f32 %v781, %v896
          %v1006 = vmul.f32 %v782, %v901
          %v1007 = vmul.f32 %v783, %v906
          %v1008 = vmul.f32 %v784, %v911
          %v1009 = vmul.f32 %v785, %v916
          %v1010 = vmul.f32 %v786, %v921
          %v1011 = vmul.f32 %v787, %v926
          %v1012 = vmul.f32 %v788, %v931
          %v1013 = vmul.f32 %v789, %v936
          %v1014 = vmul.f32 %v790, %v941
          %v1015 = vmul.f32 %v791, %v946
          %v1016 = vmul.f32 %v792, %v951
          %v1017 = vmul.f32 %v793, %v956
          %v1018 = vmul.f32 %v794, %v961
          %v1019 = vmul.f32 %v795, %v966
          %v1020 = vmul.f32 %v796, %v971
          %v1021 = vmul.f32 %v797, %v976
          %v1022 = vmul.f32 %v798, %v981
          %v1023 = vmul.f32 %v799, %v986
          %v1024 = vmul.f32 %v800, %v991
          %v1025 = vld [vmem:[%s3] sm:$0x1]
          %v1027 = vlaneseq
          %v1028 = vshrl.u32 %v1027, 7
          %v1029 = vsub.s32 0, %v1028
          %v1030 = vrot.slane %v1025, %v1029
          %v1032 = vadd.f32 %v993, %v1030
          %v1033 = vadd.f32 %v994, %v1030
          %v1034 = vadd.f32 %v995, %v1030
          %v1035 = vadd.f32 %v996, %v1030
          %v1036 = vadd.f32 %v997, %v1030
          %v1037 = vadd.f32 %v998, %v1030
          %v1038 = vadd.f32 %v999, %v1030
          %v1039 = vadd.f32 %v1000, %v1030
          %v1040 = vadd.f32 %v1001, %v1030
          %v1041 = vadd.f32 %v1002, %v1030
          %v1042 = vadd.f32 %v1003, %v1030
          %v1043 = vadd.f32 %v1004, %v1030
          %v1044 = vadd.f32 %v1005, %v1030
          %v1045 = vadd.f32 %v1006, %v1030
          %v1046 = vadd.f32 %v1007, %v1030
          %v1047 = vadd.f32 %v1008, %v1030
          %v1048 = vadd.f32 %v1009, %v1030
          %v1049 = vadd.f32 %v1010, %v1030
          %v1050 = vadd.f32 %v1011, %v1030
          %v1051 = vadd.f32 %v1012, %v1030
          %v1052 = vadd.f32 %v1013, %v1030
          %v1053 = vadd.f32 %v1014, %v1030
          %v1054 = vadd.f32 %v1015, %v1030
          %v1055 = vadd.f32 %v1016, %v1030
          %v1056 = vadd.f32 %v1017, %v1030
          %v1057 = vadd.f32 %v1018, %v1030
          %v1058 = vadd.f32 %v1019, %v1030
          %v1059 = vadd.f32 %v1020, %v1030
          %v1060 = vadd.f32 %v1021, %v1030
          %v1061 = vadd.f32 %v1022, %v1030
          %v1062 = vadd.f32 %v1023, %v1030
          %v1063 = vadd.f32 %v1024, %v1030
          %1064 = vst [vmem:[%s288] sm:$0xff] %v1032
          %1065 = vst [vmem:[%s288 + $0x8] sm:$0xff] %v1033
          %1066 = vst [vmem:[%s288 + $0x10] sm:$0xff] %v1034
          %1067 = vst [vmem:[%s288 + $0x18] sm:$0xff] %v1035
          %1068 = vst [vmem:[%s288 + $0x20] sm:$0xff] %v1036
          %1069 = vst [vmem:[%s288 + $0x28] sm:$0xff] %v1037
          %1070 = vst [vmem:[%s288 + $0x30] sm:$0xff] %v1038
          %1071 = vst [vmem:[%s288 + $0x38] sm:$0xff] %v1039
          %1072 = vst [vmem:[%s288 + $0x40] sm:$0xff] %v1040
          %1073 = vst [vmem:[%s288 + $0x48] sm:$0xff] %v1041
          %1074 = vst [vmem:[%s288 + $0x50] sm:$0xff] %v1042
          %1075 = vst [vmem:[%s288 + $0x58] sm:$0xff] %v1043
          %1076 = vst [vmem:[%s288 + $0x60] sm:$0xff] %v1044
          %1077 = vst [vmem:[%s288 + $0x68] sm:$0xff] %v1045
          %1078 = vst [vmem:[%s288 + $0x70] sm:$0xff] %v1046
          %1079 = vst [vmem:[%s288 + $0x78] sm:$0xff] %v1047
          %1080 = vst [vmem:[%s288 + $0x80] sm:$0xff] %v1048
          %1081 = vst [vmem:[%s288 + $0x88] sm:$0xff] %v1049
          %1082 = vst [vmem:[%s288 + $0x90] sm:$0xff] %v1050
          %1083 = vst [vmem:[%s288 + $0x98] sm:$0xff] %v1051
          %1084 = vst [vmem:[%s288 + $0xa0] sm:$0xff] %v1052
          %1085 = vst [vmem:[%s288 + $0xa8] sm:$0xff] %v1053
          %1086 = vst [vmem:[%s288 + $0xb0] sm:$0xff] %v1054
          %1087 = vst [vmem:[%s288 + $0xb8] sm:$0xff] %v1055
          %1088 = vst [vmem:[%s288 + $0xc0] sm:$0xff] %v1056
          %1089 = vst [vmem:[%s288 + $0xc8] sm:$0xff] %v1057
          %1090 = vst [vmem:[%s288 + $0xd0] sm:$0xff] %v1058
          %1091 = vst [vmem:[%s288 + $0xd8] sm:$0xff] %v1059
          %1092 = vst [vmem:[%s288 + $0xe0] sm:$0xff] %v1060
          %1093 = vst [vmem:[%s288 + $0xe8] sm:$0xff] %v1061
          %1094 = vst [vmem:[%s288 + $0xf0] sm:$0xff] %v1062
          %1095 = vst [vmem:[%s288 + $0xf8] sm:$0xff] %v1063
        $region67: #{gcn_forward.1} parent=54 // pred_fallthru
          _
        %s1096 = smul.u32 32, %s19
        %p1097 = scmp.lt.s32.totalorder %s1096, 63
        %s1098 = scalar_select %p1097, %s1096, 63
        %s1099 = smul.addr %s1098, 8
        %s1100 = scalar_lea.vmem %s4, %s1099
        // Predicated region
        $region68: #{gcn_forward.1} parent=54 // pred_check
          %p1101 = pneg %p141
        $region69: #{gcn_forward.1} parent=54 // pred_check_branch
          %1103 = sbr.rel (%p1101) target = $region71
        $region70: #{gcn_forward.1} parent=54 // pred_region
          %s1104 = smul.u32 32, %s19
        $region71: #{gcn_forward.1} parent=54 // pred_fallthru
          _
      $region55: #{gcn_forward.1} parent=5 // pred_fallthru
        _
      %p1105 = scmp.le.s32.totalorder 2, %s10
      // Predicated region
      $region72: #{gcn_forward.1} parent=5 // pred_check
        %p1106 = pneg %p1105
      $region73: #{gcn_forward.1} parent=5 // pred_check_branch
        %1108 = sbr.rel (%p1106) target = $region75
      $region74: #{gcn_forward.1} parent=5 // pred_region
        %s1109 = ssub.s32 %s10, 2
        // Predicated region
        $region76: #{gcn_forward.1} parent=74 // pred_check
          %p1110 = pneg %p147
        $region77: #{gcn_forward.1} parent=74 // pred_check_branch
          %1112 = sbr.rel (%p1110) target = $region79
        $region78: #{gcn_forward.1} parent=74 // pred_region
          %s1113 = smul.u32 32, %s21
          %p1114 = scmp.lt.s32.totalorder %s1113, 63
          %s1115 = scalar_select %p1114, %s1113, 63
          %s1116 = smul.addr %s1115, 8
          %s1117 = scalar_lea.vmem %s4, %s1116
        $region79: #{gcn_forward.1} parent=74 // pred_fallthru
          _
      $region75: #{gcn_forward.1} parent=5 // pred_fallthru
        _
    $region6: #{gcn_forward.1} parent=1 // loop_footer
      %s14 = sadd.s32 1, %s10
    $region7: #{gcn_forward.1} parent=1 // loop_footer_branch
      %9 = sbr.rel target = $region3
    $region8: #{gcn_forward.1} parent=1 // loop_exit
      _

</llo_original>
